<compile_context>
chip_gen: v7x
topology: tpu7x:2x2x1
jax: 0.10.0
libtpu: 0.0.40
codegen_flags: <defaults>
</compile_context>

<pallas_src>
import functools

import jax
import jax.numpy as jnp
from jax.experimental import pallas as pl
from jax.experimental.pallas import tpu as pltpu


def _focal_loss_kernel(logits_ref, target_ref, partial_ref, *,
                       gamma, alpha, block_rows, d, n_valid, has_tail,
                       use_bf16_exp):
    """Per-tile focal BCE-with-logits (stable log-sigmoid form), reduced to an
    (8, D) per-block partial sum.  Only a partial last block pays for masking."""
    i = pl.program_id(0)

    x = logits_ref[...].astype(jnp.float32)
    t = target_ref[...].astype(jnp.float32)

    # Stable log-sigmoid formulation (4 transcendentals / element):
    #   ls   = log(sigmoid(x))     = min(x, 0) - log(1 + exp(-|x|))
    #   ls1m = log(1 - sigmoid(x)) = ls - x
    #   (1-p)^gamma = exp(gamma * ls1m),  p^gamma = exp(gamma * ls)
    # NOTE: log(1 + e) (not log1p) kept on purpose: the precision loss only
    # matters when e < ~1e-7, where the affected loss term itself is < ~1e-6,
    # and plain log has a guaranteed Mosaic lowering.
    e = jnp.exp(-jnp.abs(x))
    ls = jnp.minimum(x, 0.0) - jnp.log(1.0 + e)
    ls1m = ls - x

    if use_bf16_exp:
        # bf16 EUP exp (v6e / v7x): 2x element rate for the two pow-weights.
        # p^0.2 weights tolerate bf16 (~0.4% rel) with negligible loss impact.
        w_pos = jnp.exp((gamma * ls1m).astype(jnp.bfloat16)).astype(jnp.float32)
        w_neg = jnp.exp((gamma * ls).astype(jnp.bfloat16)).astype(jnp.float32)
    else:
        w_pos = jnp.exp(gamma * ls1m)          # (1 - p)^gamma
        w_neg = jnp.exp(gamma * ls)            # p^gamma

    loss = (-alpha) * w_pos * t * ls - (1.0 - alpha) * w_neg * (1.0 - t) * ls1m

    def rowgroup_sum(v):
        # (block_rows, D) -> (8, D): pure VALU adds over sublane row groups.
        return jnp.sum(v.reshape(block_rows // 8, 8, d), axis=0)

    if has_tail:
        last = pl.num_programs(0) - 1

        @pl.when(i != last)
        def _():
            partial_ref[...] = rowgroup_sum(loss)

        @pl.when(i == last)
        def _():
            # Element-exact mask: flat index < n_valid.  Covers both the
            # BlockSpec over-read past the array end and any lane padding added
            # by the wrapper.  (select, not multiply, so garbage NaN/inf in the
            # over-read rows cannot leak into the sum)
            row = (jax.lax.broadcasted_iota(jnp.int32, loss.shape, 0)
                   + i * block_rows)
            lane = jax.lax.broadcasted_iota(jnp.int32, loss.shape, 1)
            valid = row * d + lane < n_valid
            partial_ref[...] = rowgroup_sum(jnp.where(valid, loss, 0.0))
    else:
        partial_ref[...] = rowgroup_sum(loss)


def _vmem_capacity_bytes():
    try:
        cap = getattr(pltpu.get_tpu_info(), "vmem_capacity_bytes", None)
        if cap:
            return int(cap)
    except Exception:
        pass
    return 64 << 20  # conservative fallback: v7x per-TensorCore VMEM


def _has_bf16_eup():
    """True on chips with bf16 VPU/EUP (v6e, v7x); False on v5e and older."""
    try:
        kind = jax.devices()[0].device_kind.lower()
    except Exception:
        return False
    if "tpu" not in kind:
        return False
    for old in ("v2", "v3", "v4", "v5"):
        if old in kind:
            return False
    return True


def bce_focal_loss_with_logits(logits, target, *, gamma=0.2, alpha=0.6,
                               block_rows=None, target_tile_bytes=8 << 20,
                               use_bf16_exp=None):
    """Mean-reduced BCE focal loss with logits, computed in a Pallas TPU kernel.

    Accepts arbitrary-rank logits/target of any float dtype.  Streaming bf16
    inputs halves HBM bytes (the kernel upcasts internally).
    """
    assert logits.shape == target.shape
    M = 1
    for s in logits.shape:
        M *= int(s)
    assert M > 0, "empty input"

    if use_bf16_exp is None:
        use_bf16_exp = _has_bf16_eup()

    # ---- lane-dense (rows, D) layout, D a multiple of 128 -------------------
    if logits.ndim >= 2 and logits.shape[-1] % 128 == 0:
        D = int(logits.shape[-1])
        x2 = logits.reshape(-1, D)
        t2 = target.reshape(-1, D)
    else:
        # Flatten + pad to 128 lanes; padded elements are masked in-kernel.
        D = 128
        pad = (-M) % D
        xf = logits.reshape(-1)
        tf = target.reshape(-1)
        if pad:
            xf = jnp.pad(xf, (0, pad))
            tf = jnp.pad(tf, (0, pad))
        x2 = xf.reshape(-1, D)
        t2 = tf.reshape(-1, D)
    N = int(x2.shape[0])

    in_itemsize = max(jnp.dtype(x2.dtype).itemsize, jnp.dtype(t2.dtype).itemsize)

    # ---- generation-aware tile size / VMEM budget ----------------------------
    vmem_ceiling = max(16 << 20, (_vmem_capacity_bytes() * 3) // 4)
    tile_out = 8 * D * 4
    headroom = 4 << 20
    # Largest per-input tile such that 2 inputs x 2 buffers + out bufs + headroom fit.
    max_tile_in = max(8 * D * in_itemsize,
                      (vmem_ceiling - 2 * tile_out - headroom) // 4)
    if block_rows is None:
        budget = min(int(target_tile_bytes), max_tile_in)
        rows = max(8, (budget // (D * in_itemsize)) // 8 * 8)
        block_rows = int(min(rows, ((N + 7) // 8) * 8))
    assert block_rows % 8 == 0, "block_rows must be a multiple of 8"

    num_blocks = -(-N // block_rows)                    # ceil div (static)
    has_tail = (M != num_blocks * block_rows * D)       # last block partial?

    tile_in = block_rows * D * in_itemsize
    vmem_bytes = int(min(max(4 * tile_in + 2 * tile_out + headroom, 16 << 20),
                         vmem_ceiling))

    kernel = functools.partial(
        _focal_loss_kernel,
        gamma=float(gamma),
        alpha=float(alpha),
        block_rows=block_rows,
        d=D,
        n_valid=M,
        has_tail=has_tail,
        use_bf16_exp=bool(use_bf16_exp),
    )

    partials = pl.pallas_call(
        kernel,
        out_shape=jax.ShapeDtypeStruct((num_blocks * 8, D), jnp.float32),
        grid_spec=pltpu.PrefetchScalarGridSpec(
            num_scalar_prefetch=0,
            grid=(num_blocks,),
            in_specs=[
                pl.BlockSpec((block_rows, D), lambda i: (i, 0)),
                pl.BlockSpec((block_rows, D), lambda i: (i, 0)),
            ],
            out_specs=pl.BlockSpec((8, D), lambda i: (i, 0)),
        ),
        compiler_params=pltpu.CompilerParams(
            dimension_semantics=("parallel",),   # disjoint outputs -> 2-TC friendly
            vmem_limit_bytes=vmem_bytes,
        ),
    )(x2, t2)

    # Tiny cross-block reduction + mean, done by XLA.
    return jnp.sum(partials) / jnp.float32(M)


def _reference(logits, target, gamma=0.2, alpha=0.6):
    p = jax.nn.sigmoid(logits.astype(jnp.float32))
    t = target.astype(jnp.float32)
    loss = (-alpha * (1 - p) ** gamma * t * jnp.log(p)
            - (1 - alpha) * p ** gamma * (1 - t) * jnp.log(1 - p))
    return jnp.mean(loss)


if __name__ == "__main__":
    key = jax.random.PRNGKey(0)
    k1, k2, k3, k4, k5, k6 = jax.random.split(key, 6)

    bf16_path = _has_bf16_eup()
    auto_rtol, auto_atol = (2e-2, 1e-4) if bf16_path else (1e-4, 1e-6)

    # Case 1: (16, 128) f32, lane-dense fast path, exact f32 math check.
    N, Dd = 16, 128
    logits = jax.random.normal(k1, (N, Dd), dtype=jnp.float32)
    target = (jax.random.uniform(k2, (N, Dd)) > 0.5).astype(jnp.float32)
    out = jax.block_until_ready(
        bce_focal_loss_with_logits(logits, target, use_bf16_exp=False))
    ref = _reference(logits, target)
    assert jnp.allclose(out, ref, rtol=1e-4, atol=1e-6), (out, ref)

    # Case 1b: same inputs, default (auto, chip-dependent bf16-exp) path.
    out1b = jax.block_until_ready(bce_focal_loss_with_logits(logits, target))
    assert jnp.allclose(out1b, ref, rtol=auto_rtol, atol=auto_atol), (out1b, ref)

    # Case 2: arbitrary rank, last dim NOT a multiple of 128 -> flatten+pad path
    # with element-exact masking of the padded / over-read tail.
    logits2 = jax.random.normal(k3, (4, 5, 24), dtype=jnp.float32)
    target2 = (jax.random.uniform(k4, (4, 5, 24)) > 0.5).astype(jnp.float32)
    out2 = jax.block_until_ready(bce_focal_loss_with_logits(logits2, target2))
    ref2 = _reference(logits2, target2)
    assert jnp.allclose(out2, ref2, rtol=auto_rtol, atol=auto_atol), (out2, ref2)

    # Case 3: rows not divisible by block_rows (forced small block_rows to get
    # multiple grid steps) -> only the last block pays for masking.
    N3, D3 = 20, 256
    logits3 = jax.random.normal(k5, (N3, D3), dtype=jnp.float32)
    target3 = (jax.random.uniform(k6, (N3, D3)) > 0.5).astype(jnp.float32)
    out3 = jax.block_until_ready(
        bce_focal_loss_with_logits(logits3, target3, block_rows=8))
    ref3 = _reference(logits3, target3)
    assert jnp.allclose(out3, ref3, rtol=auto_rtol, atol=auto_atol), (out3, ref3)

    # Case 4: bf16 inputs streamed directly (half the HBM bytes; kernel upcasts).
    out4 = jax.block_until_ready(
        bce_focal_loss_with_logits(logits3.astype(jnp.bfloat16),
                                   target3.astype(jnp.bfloat16)))
    ref4 = _reference(logits3.astype(jnp.bfloat16).astype(jnp.float32), target3)
    assert jnp.allclose(out4, ref4, rtol=max(auto_rtol, 1e-3),
                        atol=max(auto_atol, 1e-4)), (out4, ref4)

    print("KERNEL_OK")
</pallas_src>

<mosaic_0001>
module attributes {stable_mosaic.version = 11 : i64} {
  func.func @_focal_loss_kernel(%arg0: i32, %arg1: memref<16x128xf32, #tpu.memory_space<vmem>>, %arg2: memref<16x128xf32, #tpu.memory_space<vmem>>, %arg3: memref<8x128xf32, #tpu.memory_space<vmem>>) attributes {dimension_semantics = [#tpu.dimension_semantics<parallel>], iteration_bounds = array<i64: 1>, scalar_prefetch = 0 : i64, scratch_operands = 0 : i64, tpu.core_type = #tpu.core_type<tc>, window_params = [{transform_indices = @transform_0, window_bounds = array<i64: 16, 128>}, {transform_indices = @transform_1, window_bounds = array<i64: 16, 128>}, {transform_indices = @transform_2, window_bounds = array<i64: 8, 128>}]} {
    %c0 = arith.constant 0 : index
    %c0_0 = arith.constant 0 : index
    %0 = vector.load %arg1[%c0, %c0_0] : memref<16x128xf32, #tpu.memory_space<vmem>>, vector<16x128xf32>
    %c0_1 = arith.constant 0 : index
    %c0_2 = arith.constant 0 : index
    %1 = vector.load %arg2[%c0_1, %c0_2] : memref<16x128xf32, #tpu.memory_space<vmem>>, vector<16x128xf32>
    %2 = math.absf %0 : vector<16x128xf32>
    %cst = arith.constant 0.000000e+00 : f32
    %3 = vector.broadcast %cst : f32 to vector<16x128xf32>
    %4 = arith.subf %3, %2 : vector<16x128xf32>
    %5 = math.exp %4 : vector<16x128xf32>
    %cst_3 = arith.constant 0.000000e+00 : f32
    %6 = vector.broadcast %cst_3 : f32 to vector<16x128xf32>
    %7 = arith.minimumf %0, %6 : vector<16x128xf32>
    %cst_4 = arith.constant 1.000000e+00 : f32
    %8 = vector.broadcast %cst_4 : f32 to vector<16x128xf32>
    %9 = arith.addf %8, %5 : vector<16x128xf32>
    %10 = math.log %9 : vector<16x128xf32>
    %11 = arith.subf %7, %10 : vector<16x128xf32>
    %12 = arith.subf %11, %0 : vector<16x128xf32>
    %cst_5 = arith.constant 2.000000e-01 : f32
    %13 = vector.broadcast %cst_5 : f32 to vector<16x128xf32>
    %14 = arith.mulf %13, %12 : vector<16x128xf32>
    %15 = math.exp %14 : vector<16x128xf32>
    %cst_6 = arith.constant 2.000000e-01 : f32
    %16 = vector.broadcast %cst_6 : f32 to vector<16x128xf32>
    %17 = arith.mulf %16, %11 : vector<16x128xf32>
    %18 = math.exp %17 : vector<16x128xf32>
    %cst_7 = arith.constant -6.000000e-01 : f32
    %19 = vector.broadcast %cst_7 : f32 to vector<16x128xf32>
    %20 = arith.mulf %19, %15 : vector<16x128xf32>
    %21 = arith.mulf %20, %1 : vector<16x128xf32>
    %22 = arith.mulf %21, %11 : vector<16x128xf32>
    %cst_8 = arith.constant 4.000000e-01 : f32
    %23 = vector.broadcast %cst_8 : f32 to vector<16x128xf32>
    %24 = arith.mulf %23, %18 : vector<16x128xf32>
    %cst_9 = arith.constant 1.000000e+00 : f32
    %25 = vector.broadcast %cst_9 : f32 to vector<16x128xf32>
    %26 = arith.subf %25, %1 : vector<16x128xf32>
    %27 = arith.mulf %24, %26 : vector<16x128xf32>
    %28 = arith.mulf %27, %12 : vector<16x128xf32>
    %29 = arith.subf %22, %28 : vector<16x128xf32>
    %30 = vector.shape_cast %29 : vector<16x128xf32> to vector<2x8x128xf32>
    %cst_10 = arith.constant dense<0.000000e+00> : vector<8x128xf32>
    %31 = vector.multi_reduction <add>, %30, %cst_10 [0] : vector<2x8x128xf32> to vector<8x128xf32>
    %c0_11 = arith.constant 0 : index
    %c0_12 = arith.constant 0 : index
    %32 = vector.load %arg3[%c0_11, %c0_12] : memref<8x128xf32, #tpu.memory_space<vmem>>, vector<8x128xf32>
    tpu.vector_store %arg3[%c0_11, %c0_12], %31 {strides = array<i32>} : memref<8x128xf32, #tpu.memory_space<vmem>>, vector<8x128xf32>,
    return
  }
  func.func @transform_0(%arg0: i32) -> (i32, i32) {
    %c0_i32 = arith.constant 0 : i32
    %c0_i32_0 = arith.constant 0 : i32
    return %arg0, %c0_i32 : i32, i32
  }
  func.func @transform_1(%arg0: i32) -> (i32, i32) {
    %c0_i32 = arith.constant 0 : i32
    %c0_i32_0 = arith.constant 0 : i32
    return %arg0, %c0_i32 : i32, i32
  }
  func.func @transform_2(%arg0: i32) -> (i32, i32) {
    %c0_i32 = arith.constant 0 : i32
    %c0_i32_0 = arith.constant 0 : i32
    return %arg0, %c0_i32 : i32, i32
  }
}

</mosaic_0001>

<llo_original>
// kernel: tpu_custom_call.1
$region0: #{tpu_custom_call.1}
  #allocation0 [shape = 'u32[]', space=smem, size = 0x4, offset = 0x4, fixed_abs, tag = 'smem constant byte address 0x4 - core index']
  #allocation1 [shape = 'u32[144,128]{1,0:T(1,128)}', space=vmem, size = 0x12000, scoped, tag = 'internal scratch']
  %s0 = inlined_call_operand.hbm [shape: f32[16,128], index: 0, kind: input, shape index: {}]
  %s1 = inlined_call_operand.hbm [shape: f32[16,128], index: 1, kind: input, shape index: {}]
  %s2 = inlined_call_operand.hbm [shape: f32[8,128], index: 2, kind: output, shape index: {}]
  %s3 = sld [smem:[#allocation0]]
  $region26: #{tpu_custom_call.1} parent=0
    _
  %s5 = ssub.s32 1, %s3
  %s6 = scalar_select 0, %s5, %s3
  $region1: #{tpu_custom_call.1} parent=0
    #allocation2 [shape = 'u8[8192]{0}', space=vmem, size = 0x2000, scoped, tag = 'input window, operand 0, single buffered']
    #allocation3 [shape = 's32[1]{0}', space=sflag, size = 0x4, scoped, tag = 'scoped memory for tpu_custom_call.1']
    #allocation4 [shape = 's32[1]{0}', space=sflag, size = 0x4, scoped, tag = 'scoped memory for tpu_custom_call.1']
    #allocation5 [shape = 'u8[8192]{0}', space=vmem, size = 0x2000, scoped, tag = 'input window, operand 1, single buffered']
    #allocation6 [shape = 's32[1]{0}', space=sflag, size = 0x4, scoped, tag = 'scoped memory for tpu_custom_call.1']
    #allocation7 [shape = 'u8[4096]{0}', space=vmem, size = 0x1000, scoped, tag = 'output window, operand 0, single buffered']
    %7 = vsyncpa [#allocation3], 0
    %8 = vsyncpa [#allocation6], 0
    %9 = vsyncpa [#allocation4], 0
    // Predicated region
    $region2: #{tpu_custom_call.1} parent=1 // pred_check
      _
    $region3: #{tpu_custom_call.1} parent=1 // pred_check_branch
      %11 = sbr.rel (0) target = $region5
    $region4: #{tpu_custom_call.1} parent=1 // pred_region
      %s13 = ssub.s32 256, 256
      %14 = vsyncadd [#allocation3], %s13
      %s15 = sshll.u32 [#allocation2], 4
      %s16 = int_to_ptr.vmem [resolvable:$true] %s15
      %21 = dma.hbm_to_vmem [thread:$0]  %s0, 256, %s16, [#allocation3], 128, 128, 8
    $region5: #{tpu_custom_call.1} parent=1 // pred_fallthru
      _
    // Predicated region
    $region6: #{tpu_custom_call.1} parent=1 // pred_check
      _
    $region7: #{tpu_custom_call.1} parent=1 // pred_check_branch
      %23 = sbr.rel (0) target = $region9
    $region8: #{tpu_custom_call.1} parent=1 // pred_region
      %s25 = ssub.s32 256, 256
      %26 = vsyncadd [#allocation6], %s25
      %s27 = sshll.u32 [#allocation5], 4
      %s28 = int_to_ptr.vmem [resolvable:$true] %s27
      %33 = dma.hbm_to_vmem [thread:$0]  %s1, 256, %s28, [#allocation6], 128, 128, 8
    $region9: #{tpu_custom_call.1} parent=1 // pred_fallthru
      _
    // Predicated region
    $region10: #{tpu_custom_call.1} parent=1 // pred_check
      _
    $region11: #{tpu_custom_call.1} parent=1 // pred_check_branch
      %35 = sbr.rel (0) target = $region13
    $region12: #{tpu_custom_call.1} parent=1 // pred_region
      %36 = dma.done [#allocation3], 256
    $region13: #{tpu_custom_call.1} parent=1 // pred_fallthru
      _
    // Predicated region
    $region14: #{tpu_custom_call.1} parent=1 // pred_check
      _
    $region15: #{tpu_custom_call.1} parent=1 // pred_check_branch
      %38 = sbr.rel (0) target = $region17
    $region16: #{tpu_custom_call.1} parent=1 // pred_region
      %39 = dma.done [#allocation6], 256
    $region17: #{tpu_custom_call.1} parent=1 // pred_fallthru
      _
    %v40 = vld [vmem:[#allocation2] sm:$0xff]
    %v41 = vld [vmem:[#allocation2 + $0x8] sm:$0xff]
    %v42 = vld [vmem:[#allocation5] sm:$0xff]
    %v43 = vld [vmem:[#allocation5 + $0x8] sm:$0xff]
    %v44 = vand.u32 2147483647, %v40
    %v45 = vand.u32 2147483647, %v41
    %v46 = vsub.f32 0.0, %v44
    %v47 = vsub.f32 0.0, %v45
    %v48 = vmul.f32 %v46, 1.442695
    %v49 = vpow.pop %v48
    %v50 = vmul.f32 %v47, 1.442695
    %v51 = vpow.pop %v50
    %v52 = vmin.f32 %v40, 0.0
    %v53 = vmin.f32 %v41, 0.0
    %v54 = vadd.f32 %v49, 1.0
    %v55 = vadd.f32 %v51, 1.0
    %v56 = vlog2.pop %v54
    %v57 = vmul.f32 %v56, 0.6931472
    %v58 = vlog2.pop %v55
    %v59 = vmul.f32 %v58, 0.6931472
    %v60 = vsub.f32 %v52, %v57
    %v61 = vsub.f32 %v53, %v59
    %v62 = vsub.f32 %v60, %v40
    %v63 = vsub.f32 %v61, %v41
    %v64 = vmul.f32 %v62, 0.2
    %v65 = vmul.f32 %v63, 0.2
    %v66 = vmul.f32 %v64, 1.442695
    %v67 = vpow.pop %v66
    %v68 = vmul.f32 %v65, 1.442695
    %v69 = vpow.pop %v68
    %v70 = vmul.f32 %v60, 0.2
    %v71 = vmul.f32 %v61, 0.2
    %v72 = vmul.f32 %v70, 1.442695
    %v73 = vpow.pop %v72
    %v74 = vmul.f32 %v71, 1.442695
    %v75 = vpow.pop %v74
    %v76 = vmul.f32 %v67, -0.6
    %v77 = vmul.f32 %v69, -0.6
    %v78 = vmul.f32 %v76, %v42
    %v79 = vmul.f32 %v77, %v43
    %v80 = vmul.f32 %v78, %v60
    %v81 = vmul.f32 %v79, %v61
    %v82 = vmul.f32 %v73, 0.4
    %v83 = vmul.f32 %v75, 0.4
    %v84 = vsub.f32 1.0, %v42
    %v85 = vsub.f32 1.0, %v43
    %v86 = vmul.f32 %v82, %v84
    %v87 = vmul.f32 %v83, %v85
    %v88 = vmul.f32 %v86, %v62
    %v89 = vmul.f32 %v87, %v63
    %v90 = vsub.f32 %v80, %v88
    %v91 = vsub.f32 %v81, %v89
    %v92 = vadd.f32 %v90, %v91
    %93 = vst [vmem:[#allocation7] sm:$0xff] %v92
    // Predicated region
    $region18: #{tpu_custom_call.1} parent=1 // pred_check
      _
    $region19: #{tpu_custom_call.1} parent=1 // pred_check_branch
      %95 = sbr.rel (0) target = $region21
    $region20: #{tpu_custom_call.1} parent=1 // pred_region
      %s97 = ssub.s32 128, 128
      %98 = vsyncadd [#allocation4], %s97
      %s100 = sshll.u32 [#allocation7], 4
      %s101 = int_to_ptr.vmem [resolvable:$true] %s100
      %103 = dma.vmem_to_hbm [thread:$0]  %s101, 128, %s2, [#allocation4]
    $region21: #{tpu_custom_call.1} parent=1 // pred_fallthru
      _
    // Predicated region
    $region22: #{tpu_custom_call.1} parent=1 // pred_check
      _
    $region23: #{tpu_custom_call.1} parent=1 // pred_check_branch
      %105 = sbr.rel (0) target = $region25
    $region24: #{tpu_custom_call.1} parent=1 // pred_region
      %106 = dma.done [#allocation4], 128
    $region25: #{tpu_custom_call.1} parent=1 // pred_fallthru
      _
    %107 = vsyncpa [#allocation3], 1
    %108 = vsyncpa [#allocation6], 1
    %109 = vsyncpa [#allocation4], 1

</llo_original>
